<compile_context>
chip_gen: v7x
topology: tpu7x:2x2x1
jax: 0.10.0
libtpu: 0.0.40
codegen_flags: <defaults>
</compile_context>

<pallas_src>
import functools
import math

import jax
import jax.numpy as jnp
from jax import lax
from jax.experimental import pallas as pl
from jax.experimental.pallas import tpu as pltpu

LANES = 128


def _chip_tuning():
    """Returns (target_tile_rows, vmem_limit_bytes, max_splits) for the local TPU."""
    kind = ""
    try:
        kind = jax.devices()[0].device_kind.lower()
    except Exception:
        pass
    one_tc = any(s in kind for s in ("v5e", "v5 lite", "v5lite", "v6e", "v6 lite", "v6lite"))
    max_splits = 1 if one_tc else 2          # v7x / v4 / v5p have 2 TensorCores per chip
    if ("v7" in kind) or ("7x" in kind):
        # 4 MiB/input/buffer -> 16 MiB double-buffered; 64 MiB physical VMEM per TC.
        return 8192, 48 << 20, max_splits
    if "v6" in kind:
        # 8 MiB/input/buffer -> 32 MiB double-buffered; 128 MiB physical VMEM.
        return 16384, 64 << 20, max_splits
    # v5e / v5p / v4 / unknown: 4 MiB/input/buffer; this limit is safe on every generation.
    return 8192, 48 << 20, max_splits


def _focal_loss_kernel(pred_ref, tgt_ref, out_ref, acc_ref, *,
                       alpha, gamma, rows, tile_rows, tiles_per_split):
    c = pl.program_id(0)             # split index ("parallel")
    i = pl.program_id(1)             # tile index inside the split ("arbitrary")

    @pl.when(i == 0)
    def _init():
        acc_ref[...] = jnp.zeros_like(acc_ref)

    x = pred_ref[...].astype(jnp.float32)      # logits  (tile_rows, LANES)
    y = tgt_ref[...].astype(jnp.float32)       # targets (tile_rows, LANES)

    # Numerically-stable BCE with logits (same formula nn.BCEWithLogitsLoss uses):
    #   bce = max(x, 0) - x*y + log1p(exp(-|x|))
    bce = jnp.maximum(x, 0.0) - x * y + jnp.log1p(jnp.exp(-jnp.abs(x)))

    # pt = exp(-bce): exactly the torch formula. The extra EUP op is free at the
    # memory bound and removes the f32 divide + sigmoid blend from the VALU slot.
    pt = jnp.exp(-bce)

    one_minus_pt = 1.0 - pt
    if float(gamma).is_integer() and 0.0 <= gamma <= 16.0:
        g = int(gamma)
        w = jnp.ones_like(one_minus_pt) if g == 0 else one_minus_pt
        for _ in range(max(g - 1, 0)):                 # gamma=2 -> one VALU mul
            w = w * one_minus_pt
    else:
        w = one_minus_pt ** jnp.float32(gamma)         # general-gamma fallback
    focal = (alpha * w) * bce

    # Row-level mask: covers the (at most one) partial tile per split and any
    # clamped tile lying entirely past the data (valid <= 0 zeroes it out).
    # jnp.where is a select, so garbage/NaN in dead rows cannot propagate.
    t = c * tiles_per_split + i                        # logical tile id (unclamped)
    valid = rows - t * tile_rows
    row_idx = lax.broadcasted_iota(jnp.int32, (tile_rows, 1), 0)
    focal = jnp.where(row_idx < valid, focal, 0.0)

    # Vector accumulator; the cross-lane reduce is deferred to the finalize step.
    acc_ref[...] += jnp.sum(focal, axis=0, keepdims=True)

    @pl.when(i == pl.num_programs(1) - 1)
    def _finalize():
        out_ref[0, 0] = jnp.sum(acc_ref[...])


def _focal_sum_dense(x, y, alpha, gamma):
    """Plain-jnp focal-loss *sum* (used only for the <128-element ragged tail)."""
    x = x.astype(jnp.float32)
    y = y.astype(jnp.float32)
    bce = jnp.maximum(x, 0.0) - x * y + jnp.log1p(jnp.exp(-jnp.abs(x)))
    pt = jnp.exp(-bce)
    return jnp.sum(alpha * (1.0 - pt) ** gamma * bce)


def focal_loss(predicted, actual, *, alpha=0.75, gamma=2.0,
               tile_rows_override=None, num_splits_override=None):
    """Mean focal loss over all elements (matches FocalLoss(reduction='mean'))."""
    assert predicted.shape == actual.shape
    n_valid = math.prod(predicted.shape)

    pred_flat = predicted.reshape(-1)
    tgt_flat = actual.reshape(-1)

    # 128-aligned prefix goes through the kernel; the <128-element ragged tail
    # (if any) is folded in with plain jnp — no full-tensor jnp.pad copies.
    n_aligned = (n_valid // LANES) * LANES
    total = jnp.float32(0.0)
    if n_aligned < n_valid:
        total = total + _focal_sum_dense(pred_flat[n_aligned:], tgt_flat[n_aligned:],
                                         alpha, gamma)

    if n_aligned:
        rows = n_aligned // LANES
        if n_aligned == n_valid:
            pred2d = pred_flat.reshape(rows, LANES)        # free reshape, no copy
            tgt2d = tgt_flat.reshape(rows, LANES)
        else:
            pred2d = pred_flat[:n_aligned].reshape(rows, LANES)
            tgt2d = tgt_flat[:n_aligned].reshape(rows, LANES)

        target_rows, vmem_limit, max_splits = _chip_tuning()
        if tile_rows_override is not None:
            target_rows = int(tile_rows_override)          # must be a multiple of 8
        if num_splits_override is not None:
            max_splits = int(num_splits_override)

        # Block sublane dim must be a multiple of 8 or equal the full array dim.
        tile_rows = rows if rows <= target_rows else target_rows
        n_tiles = pl.cdiv(rows, tile_rows)
        num_splits = max(1, min(max_splits, n_tiles))
        tiles_per_split = pl.cdiv(n_tiles, num_splits)

        def in_index_map(c, i):
            # Clamp so the DMA always stays in-bounds; the kernel zeroes the
            # contribution of any tile lying past the end of the data.
            return (jnp.minimum(c * tiles_per_split + i, n_tiles - 1), 0)

        kernel = functools.partial(
            _focal_loss_kernel,
            alpha=float(alpha), gamma=float(gamma),
            rows=rows, tile_rows=tile_rows, tiles_per_split=tiles_per_split)

        itemsize = jnp.dtype(pred2d.dtype).itemsize + jnp.dtype(tgt2d.dtype).itemsize
        cost = pl.CostEstimate(flops=12 * n_aligned,
                               transcendentals=3 * n_aligned,
                               bytes_accessed=itemsize * n_aligned)

        partials = pl.pallas_call(
            kernel,
            out_shape=jax.ShapeDtypeStruct((num_splits, 1), jnp.float32),
            grid_spec=pltpu.PrefetchScalarGridSpec(
                num_scalar_prefetch=0,
                grid=(num_splits, tiles_per_split),
                in_specs=[
                    pl.BlockSpec((tile_rows, LANES), in_index_map),
                    pl.BlockSpec((tile_rows, LANES), in_index_map),
                ],
                out_specs=pl.BlockSpec((1, 1), lambda c, i: (c, 0),
                                       memory_space=pltpu.SMEM),
                scratch_shapes=[pltpu.VMEM((1, LANES), jnp.float32)],
            ),
            # TODO(synk): on v7x, verify via xprof that the leading "parallel" axis
            # actually engages both TensorCores; if not, switch it to pltpu.CORE_PARALLEL.
            compiler_params=pltpu.CompilerParams(
                dimension_semantics=("parallel", "arbitrary"),
                vmem_limit_bytes=vmem_limit),
            cost_estimate=cost,
        )(pred2d, tgt2d)

        total = total + jnp.sum(partials)

    return total / jnp.float32(n_valid)


def _focal_loss_ref(predicted, actual, *, alpha=0.75, gamma=2.0):
    x = predicted.astype(jnp.float32)
    y = actual.astype(jnp.float32)
    bce = jnp.maximum(x, 0.0) - x * y + jnp.log1p(jnp.exp(-jnp.abs(x)))
    pt = jnp.exp(-bce)
    return jnp.mean(alpha * (1.0 - pt) ** gamma * bce)


if __name__ == "__main__":
    key = jax.random.PRNGKey(0)
    k1, k2, k3, k4, k5, k6 = jax.random.split(key, 6)

    # 1) NCHW-style input, as the PyTorch module would receive (aligned path).
    shape = (2, 4, 16, 16)
    predicted = jax.random.normal(k1, shape, dtype=jnp.float32)
    actual = jax.random.bernoulli(k2, 0.5, shape).astype(jnp.float32)
    loss = jax.block_until_ready(focal_loss(predicted, actual))
    ref = _focal_loss_ref(predicted, actual)
    assert jnp.allclose(loss, ref, rtol=1e-5, atol=1e-6), (loss, ref)

    # 2) numel not a multiple of 128: exercises the jnp ragged-tail path
    #    (no full-tensor padding copies).
    shape2 = (3, 5, 7, 11)
    predicted2 = jax.random.normal(k3, shape2, dtype=jnp.float32)
    actual2 = jax.random.bernoulli(k4, 0.5, shape2).astype(jnp.float32)
    loss2 = jax.block_until_ready(focal_loss(predicted2, actual2))
    ref2 = _focal_loss_ref(predicted2, actual2)
    assert jnp.allclose(loss2, ref2, rtol=1e-5, atol=1e-6), (loss2, ref2)

    # 3) Multi-tile + split + partial-tile masking path, exercised with a small
    #    forced tile so the test stays tiny (264 rows, 64-row tiles, 2 splits).
    shape3 = (4, 8, 32, 33)
    predicted3 = jax.random.normal(k5, shape3, dtype=jnp.float32)
    actual3 = jax.random.bernoulli(k6, 0.5, shape3).astype(jnp.float32)
    loss3 = jax.block_until_ready(
        focal_loss(predicted3, actual3, tile_rows_override=64, num_splits_override=2))
    ref3 = _focal_loss_ref(predicted3, actual3)
    assert jnp.allclose(loss3, ref3, rtol=1e-5, atol=1e-6), (loss3, ref3)

    print("KERNEL_OK")
</pallas_src>

<mosaic_0001>
module attributes {stable_mosaic.version = 11 : i64} {
  func.func @_focal_loss_kernel(%arg0: i32, %arg1: i32, %arg2: memref<16x128xf32, #tpu.memory_space<vmem>>, %arg3: memref<16x128xf32, #tpu.memory_space<vmem>>, %arg4: memref<1x1xf32, #tpu.memory_space<smem>>, %arg5: memref<1x128xf32, #tpu.memory_space<vmem>>) attributes {dimension_semantics = [#tpu.dimension_semantics<parallel>, #tpu.dimension_semantics<arbitrary>], iteration_bounds = array<i64: 1, 1>, scalar_prefetch = 0 : i64, scratch_operands = 1 : i64, tpu.core_type = #tpu.core_type<tc>, window_params = [{transform_indices = @transform_0, window_bounds = array<i64: 16, 128>}, {transform_indices = @transform_1, window_bounds = array<i64: 16, 128>}, {transform_indices = @transform_2, window_bounds = array<i64: 1, 1>}]} {
    %c0_i32 = arith.constant 0 : i32
    %0 = arith.cmpi eq, %arg1, %c0_i32 : i32
    %1 = arith.extui %0 : i1 to i32
    %c0_i32_0 = arith.constant 0 : i32
    %2 = arith.cmpi ne, %1, %c0_i32_0 : i32
    scf.if %2 {
      %cst_17 = arith.constant 0.000000e+00 : f32
      %43 = vector.broadcast %cst_17 : f32 to vector<1x128xf32>
      %c0_18 = arith.constant 0 : index
      %c0_19 = arith.constant 0 : index
      %44 = vector.load %arg5[%c0_18, %c0_19] : memref<1x128xf32, #tpu.memory_space<vmem>>, vector<1x128xf32>
      tpu.vector_store %arg5[%c0_18, %c0_19], %43 {strides = array<i32>} : memref<1x128xf32, #tpu.memory_space<vmem>>, vector<1x128xf32>,
    } else {
    }
    %c0 = arith.constant 0 : index
    %c0_1 = arith.constant 0 : index
    %3 = vector.load %arg2[%c0, %c0_1] : memref<16x128xf32, #tpu.memory_space<vmem>>, vector<16x128xf32>
    %c0_2 = arith.constant 0 : index
    %c0_3 = arith.constant 0 : index
    %4 = vector.load %arg3[%c0_2, %c0_3] : memref<16x128xf32, #tpu.memory_space<vmem>>, vector<16x128xf32>
    %cst = arith.constant 0.000000e+00 : f32
    %5 = vector.broadcast %cst : f32 to vector<16x128xf32>
    %6 = arith.maximumf %3, %5 : vector<16x128xf32>
    %7 = arith.mulf %3, %4 : vector<16x128xf32>
    %8 = arith.subf %6, %7 : vector<16x128xf32>
    %9 = math.absf %3 : vector<16x128xf32>
    %cst_4 = arith.constant 0.000000e+00 : f32
    %10 = vector.broadcast %cst_4 : f32 to vector<16x128xf32>
    %11 = arith.subf %10, %9 : vector<16x128xf32>
    %12 = math.exp %11 : vector<16x128xf32>
    %13 = math.log1p %12 : vector<16x128xf32>
    %14 = arith.addf %8, %13 : vector<16x128xf32>
    %cst_5 = arith.constant 0.000000e+00 : f32
    %15 = vector.broadcast %cst_5 : f32 to vector<16x128xf32>
    %16 = arith.subf %15, %14 : vector<16x128xf32>
    %17 = math.exp %16 : vector<16x128xf32>
    %cst_6 = arith.constant 1.000000e+00 : f32
    %18 = vector.broadcast %cst_6 : f32 to vector<16x128xf32>
    %19 = arith.subf %18, %17 : vector<16x128xf32>
    %20 = arith.mulf %19, %19 : vector<16x128xf32>
    %cst_7 = arith.constant 7.500000e-01 : f32
    %21 = vector.broadcast %cst_7 : f32 to vector<16x128xf32>
    %22 = arith.mulf %21, %20 : vector<16x128xf32>
    %23 = arith.mulf %22, %14 : vector<16x128xf32>
    %c1_i32 = arith.constant 1 : i32
    %24 = arith.muli %arg0, %c1_i32 : i32
    %25 = arith.addi %24, %arg1 : i32
    %c16_i32 = arith.constant 16 : i32
    %26 = arith.muli %25, %c16_i32 : i32
    %c16_i32_8 = arith.constant 16 : i32
    %27 = arith.subi %c16_i32_8, %26 : i32
    %28 = tpu.iota {dimensions = array<i32: 0>} : vector<16x1xi32>
    %29 = vector.broadcast %27 : i32 to vector<16x1xi32>
    %30 = arith.cmpi slt, %28, %29 : vector<16x1xi32>
    %cst_9 = arith.constant 0.000000e+00 : f32
    %31 = vector.shape_cast %30 : vector<16x1xi1> to vector<16x1xi1>
    %32 = vector.broadcast %31 : vector<16x1xi1> to vector<16x128xi1>
    %33 = vector.broadcast %cst_9 : f32 to vector<16x128xf32>
    %34 = arith.select %32, %23, %33 : vector<16x128xi1>, vector<16x128xf32>
    %c0_10 = arith.constant 0 : index
    %c0_11 = arith.constant 0 : index
    %35 = vector.load %arg5[%c0_10, %c0_11] : memref<1x128xf32, #tpu.memory_space<vmem>>, vector<1x128xf32>
    %cst_12 = arith.constant dense<0.000000e+00> : vector<128xf32>
    %36 = vector.multi_reduction <add>, %34, %cst_12 [0] : vector<16x128xf32> to vector<128xf32>
    %37 = vector.shape_cast %36 : vector<128xf32> to vector<1x128xf32>
    %38 = arith.addf %35, %37 : vector<1x128xf32>
    %c0_13 = arith.constant 0 : index
    %c0_14 = arith.constant 0 : index
    %39 = vector.load %arg5[%c0_13, %c0_14] : memref<1x128xf32, #tpu.memory_space<vmem>>, vector<1x128xf32>
    tpu.vector_store %arg5[%c0_13, %c0_14], %38 {strides = array<i32>} : memref<1x128xf32, #tpu.memory_space<vmem>>, vector<1x128xf32>,
    %c0_i32_15 = arith.constant 0 : i32
    %40 = arith.cmpi eq, %arg1, %c0_i32_15 : i32
    %41 = arith.extui %40 : i1 to i32
    %c0_i32_16 = arith.constant 0 : i32
    %42 = arith.cmpi ne, %41, %c0_i32_16 : i32
    scf.if %42 {
      %c0_17 = arith.constant 0 : index
      %c0_18 = arith.constant 0 : index
      %43 = vector.load %arg5[%c0_17, %c0_18] : memref<1x128xf32, #tpu.memory_space<vmem>>, vector<1x128xf32>
      %44 = vector.shape_cast %43 : vector<1x128xf32> to vector<1x1x128xf32>
      %cst_19 = arith.constant dense<0.000000e+00> : vector<1xf32>
      %45 = vector.multi_reduction <add>, %44, %cst_19 [1, 2] : vector<1x1x128xf32> to vector<1xf32>
      %46 = vector.shape_cast %45 : vector<1xf32> to vector<1x1x1xf32>
      %47 = vector.extract %46[0, 0, 0] : f32 from vector<1x1x1xf32>
      %c0_20 = arith.constant 0 : index
      %c0_21 = arith.constant 0 : index
      %48 = memref.load %arg4[%c0_20, %c0_21] : memref<1x1xf32, #tpu.memory_space<smem>>
      memref.store %47, %arg4[%c0_20, %c0_21] : memref<1x1xf32, #tpu.memory_space<smem>>
    } else {
    }
    return
  }
  func.func @transform_0(%arg0: i32, %arg1: i32) -> (i32, i32) {
    %c1_i32 = arith.constant 1 : i32
    %0 = arith.muli %arg0, %c1_i32 : i32
    %1 = arith.addi %0, %arg1 : i32
    %c0_i32 = arith.constant 0 : i32
    %2 = arith.minsi %1, %c0_i32 : i32
    %c0_i32_0 = arith.constant 0 : i32
    %c0_i32_1 = arith.constant 0 : i32
    return %2, %c0_i32_0 : i32, i32
  }
  func.func @transform_1(%arg0: i32, %arg1: i32) -> (i32, i32) {
    %c1_i32 = arith.constant 1 : i32
    %0 = arith.muli %arg0, %c1_i32 : i32
    %1 = arith.addi %0, %arg1 : i32
    %c0_i32 = arith.constant 0 : i32
    %2 = arith.minsi %1, %c0_i32 : i32
    %c0_i32_0 = arith.constant 0 : i32
    %c0_i32_1 = arith.constant 0 : i32
    return %2, %c0_i32_0 : i32, i32
  }
  func.func @transform_2(%arg0: i32, %arg1: i32) -> (i32, i32) {
    %c0_i32 = arith.constant 0 : i32
    %c0_i32_0 = arith.constant 0 : i32
    return %arg0, %c0_i32 : i32, i32
  }
}

</mosaic_0001>

<llo_original>
// kernel: tpu_custom_call.1
$region0: #{tpu_custom_call.1}
  #allocation0 [shape = 'u32[]', space=smem, size = 0x4, offset = 0x4, fixed_abs, tag = 'smem constant byte address 0x4 - core index']
  #allocation1 [shape = 'u32[144,128]{1,0:T(1,128)}', space=vmem, size = 0x12000, scoped, tag = 'internal scratch']
  #allocation2 [shape = 'f32[1,128]{1,0:T(1,128)}', space=vmem, size = 0x200, scoped, tag = 'scratch operand']
  %s0 = inlined_call_operand.hbm [shape: f32[16,128], index: 0, kind: input, shape index: {}]
  %s1 = inlined_call_operand.hbm [shape: f32[16,128], index: 1, kind: input, shape index: {}]
  %s2 = inlined_call_operand.hbm [shape: f32[1,1], index: 2, kind: output, shape index: {}]
  %s3 = sld [smem:[#allocation0]]
  $region34: #{tpu_custom_call.1} parent=0
    _
  %s5 = ssub.s32 1, %s3
  %s6 = scalar_select 0, %s5, %s3
  $region1: #{tpu_custom_call.1} parent=0
    #allocation3 [shape = 'u8[8192]{0}', space=vmem, size = 0x2000, scoped, tag = 'input window, operand 0, single buffered']
    #allocation4 [shape = 's32[1]{0}', space=sflag, size = 0x4, scoped, tag = 'scoped memory for tpu_custom_call.1']
    #allocation5 [shape = 's32[1]{0}', space=sflag, size = 0x4, scoped, tag = 'scoped memory for tpu_custom_call.1']
    #allocation6 [shape = 'u8[8192]{0}', space=vmem, size = 0x2000, scoped, tag = 'input window, operand 1, single buffered']
    #allocation7 [shape = 's32[1]{0}', space=sflag, size = 0x4, scoped, tag = 'scoped memory for tpu_custom_call.1']
    #allocation8 [shape = 'u8[512]{0}', space=smem, size = 0x200, scoped, tag = 'output window, operand 0, single buffered']
    %7 = vsyncpa [#allocation4], 0
    %8 = vsyncpa [#allocation7], 0
    %9 = vsyncpa [#allocation5], 0
    // Predicated region
    $region2: #{tpu_custom_call.1} parent=1 // pred_check
      _
    $region3: #{tpu_custom_call.1} parent=1 // pred_check_branch
      %11 = sbr.rel (0) target = $region5
    $region4: #{tpu_custom_call.1} parent=1 // pred_region
      %s12 = sadd.s32 0, 0
      %p13 = scmp.lt.s32.totalorder %s12, 0
      %s14 = scalar_select %p13, %s12, 0
      %s15 = smul.u32 2, %s14
      %s17 = ssub.s32 256, 256
      %18 = vsyncadd [#allocation4], %s17
      %s19 = smul.addr %s15, 128
      %s20 = scalar_lea.hbm %s0, %s19
      %s21 = sshll.u32 [#allocation3], 4
      %s22 = int_to_ptr.vmem [resolvable:$true] %s21
      %27 = dma.hbm_to_vmem [thread:$0]  %s20, 256, %s22, [#allocation4], 128, 128, 8
    $region5: #{tpu_custom_call.1} parent=1 // pred_fallthru
      _
    // Predicated region
    $region6: #{tpu_custom_call.1} parent=1 // pred_check
      _
    $region7: #{tpu_custom_call.1} parent=1 // pred_check_branch
      %29 = sbr.rel (0) target = $region9
    $region8: #{tpu_custom_call.1} parent=1 // pred_region
      %s30 = sadd.s32 0, 0
      %p31 = scmp.lt.s32.totalorder %s30, 0
      %s32 = scalar_select %p31, %s30, 0
      %s33 = smul.u32 2, %s32
      %s35 = ssub.s32 256, 256
      %36 = vsyncadd [#allocation7], %s35
      %s37 = smul.addr %s33, 128
      %s38 = scalar_lea.hbm %s1, %s37
      %s39 = sshll.u32 [#allocation6], 4
      %s40 = int_to_ptr.vmem [resolvable:$true] %s39
      %45 = dma.hbm_to_vmem [thread:$0]  %s38, 256, %s40, [#allocation7], 128, 128, 8
    $region9: #{tpu_custom_call.1} parent=1 // pred_fallthru
      _
    // Predicated region
    $region10: #{tpu_custom_call.1} parent=1 // pred_check
      _
    $region11: #{tpu_custom_call.1} parent=1 // pred_check_branch
      %47 = sbr.rel (0) target = $region13
    $region12: #{tpu_custom_call.1} parent=1 // pred_region
      %48 = dma.done [#allocation4], 256
    $region13: #{tpu_custom_call.1} parent=1 // pred_fallthru
      _
    // Predicated region
    $region14: #{tpu_custom_call.1} parent=1 // pred_check
      _
    $region15: #{tpu_custom_call.1} parent=1 // pred_check_branch
      %50 = sbr.rel (0) target = $region17
    $region16: #{tpu_custom_call.1} parent=1 // pred_region
      %51 = dma.done [#allocation7], 256
    $region17: #{tpu_custom_call.1} parent=1 // pred_fallthru
      _
    %s52 = sadd.s32 0, 0
    %p53 = scmp.lt.s32.totalorder %s52, 0
    %s54 = scalar_select %p53, %s52, 0
    %s55 = smul.u32 2, %s54
    %s56 = sadd.s32 0, 0
    %p57 = scmp.lt.s32.totalorder %s56, 0
    %s58 = scalar_select %p57, %s56, 0
    %s59 = smul.u32 2, %s58
    %p60 = scmp.eq.s32.totalorder 0, 0
    // Predicated region
    $region18: #{tpu_custom_call.1} parent=1 // pred_check
      %p61 = pneg %p60
    $region19: #{tpu_custom_call.1} parent=1 // pred_check_branch
      %63 = sbr.rel (%p61) target = $region21
    $region20: #{tpu_custom_call.1} parent=1 // pred_region
      %64 = vst [vmem:[#allocation2] sm:$0x1] 0.0
    $region21: #{tpu_custom_call.1} parent=1 // pred_fallthru
      _
    %v65 = vld [vmem:[#allocation3] sm:$0xff]
    %v66 = vld [vmem:[#allocation3 + $0x8] sm:$0xff]
    %v67 = vld [vmem:[#allocation6] sm:$0xff]
    %v68 = vld [vmem:[#allocation6 + $0x8] sm:$0xff]
    %v69 = vmax.f32 %v65, 0.0
    %v70 = vmax.f32 %v66, 0.0
    %v71 = vmul.f32 %v65, %v67
    %v72 = vmul.f32 %v66, %v68
    %v73 = vsub.f32 %v69, %v71
    %v74 = vsub.f32 %v70, %v72
    %v75 = vand.u32 2147483647, %v65
    %v76 = vand.u32 2147483647, %v66
    %v77 = vsub.f32 0.0, %v75
    %v78 = vsub.f32 0.0, %v76
    %v79 = vmul.f32 %v77, 1.442695
    %v80 = vpow.pop %v79
    %v81 = vmul.f32 %v78, 1.442695
    %v82 = vpow.pop %v81
    %v83 = vadd.f32 %v80, 1.0
    %v84 = vlog2.pop %v83
    %v85 = vmul.f32 %v84, 0.6931472
    %v86 = vmul.f32 -0.5, %v80
    %v87 = vadd.f32 %v86, 1.0
    %v88 = vmul.f32 %v87, %v80
    %v89 = vand.u32 2147483647, %v80
    %vm90 = vcmp.lt.f32.partialorder %v89, 0.0004427343
    %v91 = vsel %vm90, %v88, %v85
    %v92 = vadd.f32 %v82, 1.0
    %v93 = vlog2.pop %v92
    %v94 = vmul.f32 %v93, 0.6931472
    %v95 = vmul.f32 -0.5, %v82
    %v96 = vadd.f32 %v95, 1.0
    %v97 = vmul.f32 %v96, %v82
    %v98 = vand.u32 2147483647, %v82
    %vm99 = vcmp.lt.f32.partialorder %v98, 0.0004427343
    %v100 = vsel %vm99, %v97, %v94
    %v101 = vadd.f32 %v73, %v91
    %v102 = vadd.f32 %v74, %v100
    %v103 = vsub.f32 0.0, %v101
    %v104 = vsub.f32 0.0, %v102
    %v105 = vmul.f32 %v103, 1.442695
    %v106 = vpow.pop %v105
    %v107 = vmul.f32 %v104, 1.442695
    %v108 = vpow.pop %v107
    %v109 = vsub.f32 1.0, %v106
    %v110 = vsub.f32 1.0, %v108
    %v111 = vmul.f32 %v109, %v109
    %v112 = vmul.f32 %v110, %v110
    %v113 = vmul.f32 %v111, 0.75
    %v114 = vmul.f32 %v112, 0.75
    %v115 = vmul.f32 %v113, %v101
    %v116 = vmul.f32 %v114, %v102
    %s117 = sadd.s32 0, 0
    %s118 = smul.u32 %s117, 16
    %s119 = ssub.s32 16, %s118
    %v120 = vlaneseq
    %v121 = vshrl.u32 %v120, 7
    %v122 = vadd.s32 %v121, 8
    %v123 = vstv %s119
    %vm124 = vcmp.lt.s32.totalorder %v121, %v123
    %vm125 = vcmp.lt.s32.totalorder %v122, %v123
    %v126 = vsel %vm124, 1, 0
    %v127 = vsel %vm125, 1, 0
    %vm128 = vcmp.eq.s32.totalorder %v126, 1
    %vm129 = vcmp.eq.s32.totalorder %v127, 1
    %v130 = vsel %vm128, %v115, 0.0
    %v131 = vsel %vm129, %v116, 0.0
    %v132 = vld [vmem:[#allocation2] sm:$0x1]
    %v133 = vadd.f32 %v130, %v131
    %v134 = vrot.slane %v133, 4
    %v135 = vadd.f32 %v133, %v134
    %v136 = vrot.slane %v135, 2
    %v137 = vadd.f32 %v135, %v136
    %v138 = vrot.slane %v137, 1
    %v139 = vadd.f32 %v137, %v138
    %v140 = vadd.f32 %v132, %v139
    %141 = vst [vmem:[#allocation2] sm:$0x1] %v140
    // Predicated region
    $region22: #{tpu_custom_call.1} parent=1 // pred_check
      %p142 = pneg %p60
    $region23: #{tpu_custom_call.1} parent=1 // pred_check_branch
      %144 = sbr.rel (%p142) target = $region25
    $region24: #{tpu_custom_call.1} parent=1 // pred_region
      %v145 = vld [vmem:[#allocation2] sm:$0x1]
      %vm146 = vcmask 1040384
      %v147 = vsel %vm146, %v145, 0.0
      %148 = vadd.xlane.f32.xlu0 %v147
      %v149 = vpop.xlane.xlu0 %148
      %v150 = vrot.slane %v149, 4
      %v151 = vadd.f32 %v149, %v150
      %v152 = vrot.slane %v151, 2
      %v153 = vadd.f32 %v151, %v152
      %v154 = vrot.slane %v153, 1
      %v155 = vadd.f32 %v153, %v154
      %s156 = vtos %v155
      %s157 = scalar_lea.smem [#allocation8], 0
      %158 = sst [smem:[%s157]] %s156
    $region25: #{tpu_custom_call.1} parent=1 // pred_fallthru
      _
    // Predicated region
    $region26: #{tpu_custom_call.1} parent=1 // pred_check
      _
    $region27: #{tpu_custom_call.1} parent=1 // pred_check_branch
      %160 = sbr.rel (0) target = $region29
    $region28: #{tpu_custom_call.1} parent=1 // pred_region
      %s162 = ssub.s32 16, 16
      %163 = vsyncadd [#allocation5], %s162
      %166 = dma.smem_to_hbm [#allocation8], 16, %s2, [#allocation5]
    $region29: #{tpu_custom_call.1} parent=1 // pred_fallthru
      _
    // Predicated region
    $region30: #{tpu_custom_call.1} parent=1 // pred_check
      _
    $region31: #{tpu_custom_call.1} parent=1 // pred_check_branch
      %168 = sbr.rel (0) target = $region33
    $region32: #{tpu_custom_call.1} parent=1 // pred_region
      %169 = dma.done [#allocation5], 16
    $region33: #{tpu_custom_call.1} parent=1 // pred_fallthru
      _
    %170 = sfence
    %171 = vsyncpa [#allocation4], 1
    %172 = vsyncpa [#allocation7], 1
    %173 = vsyncpa [#allocation5], 1

</llo_original>
